<compile_context>
chip_gen: v7x
topology: tpu7x:2x2x1
jax: 0.10.0
libtpu: 0.0.40
codegen_flags: <defaults>
</compile_context>

<pallas_src>
import functools

import jax
import jax.numpy as jnp
import numpy as np
from jax.experimental import pallas as pl
from jax.experimental.pallas import tpu as pltpu


def _round_up(x, m):
    return (x + m - 1) // m * m


def _lane_pad(v):
    # 128-lane dense; once a dim exceeds 128, pad to the 256-wide v6e/v7x MXU tile.
    mult = 256 if v > 128 else 128
    return _round_up(max(v, 128), mult)


def _encoder_kernel(x_ref, wconv_ref, shift_ref, wfc_ref, bfc_ref, out_ref,
                    *, ksize, length, inv_len):
    """One grid step == TB batch elements.

    x_ref     : (TB, L+2p, C)   padded input, compute dtype
    wconv_ref : (K, C, Hp)      conv weight with BN scale folded in (compute dtype)
    shift_ref : (1, Hp) f32     folded BatchNorm shift
    wfc_ref   : (Hp, NCp)       FC weight (compute dtype)
    bfc_ref   : (1, NCp) f32    FC bias
    out_ref   : (1, TB, NCp) f32
    """
    tb = x_ref.shape[0]
    hp = wconv_ref.shape[-1]
    x = x_ref[...]                                              # (TB, Lp, C)

    # Conv1d as K accumulated shifted matmuls on the MXU, f32 accumulation.
    acc = jnp.zeros((tb * length, hp), jnp.float32)
    for k in range(ksize):                                      # K is small & static
        xk = x[:, k:k + length, :].reshape(tb * length, x.shape[-1])
        acc = acc + jnp.dot(xk, wconv_ref[k],
                            preferred_element_type=jnp.float32)  # (TB*L, Hp)

    # Folded BatchNorm shift (scale already folded into wconv) + exact SiLU.
    y = acc + shift_ref[...]
    y = 0.5 * y * (jnp.tanh(0.5 * y) + 1.0)                      # x*sigmoid(x), 1 EUP op

    # Global average pool over length (per sample), in f32.
    gap = jnp.sum(y.reshape(tb, length, hp), axis=1) * inv_len   # (TB, Hp) f32

    # Linear head on the MXU.
    out = jnp.dot(gap.astype(wfc_ref.dtype), wfc_ref[...],
                  preferred_element_type=jnp.float32) + bfc_ref[...]   # (TB, NCp)
    out_ref[0] = out


def encoder1d_forward(x_ncl, conv_w, bn_gamma, bn_beta, bn_mean, bn_var,
                      fc_w, fc_b, *, eps=1e-5, compute_dtype=jnp.bfloat16,
                      batch_block=None):
    """x_ncl: (N, C_in, L) float32 (PyTorch NCL layout)."""
    n, c_in, length = x_ncl.shape
    hidden, _, ksize = conv_w.shape
    num_classes = fc_w.shape[0]
    # TODO(synk): even kernel sizes make PyTorch's Conv1d(padding=k//2) output
    # length L+1; only odd k (same-length conv) is handled here.
    assert ksize % 2 == 1, "only odd kernel_size supported"
    pad = ksize // 2
    lp = length + 2 * pad

    hp = _lane_pad(hidden)
    ncp = _lane_pad(num_classes)
    itm = jnp.dtype(compute_dtype).itemsize

    # ---- batch-block size: target ~512 LHS rows, cap by VMEM, keep >=2 steps ----
    if batch_block is None:
        tb = max(1, 512 // max(length, 1))
        act_cap = max(1, (8 << 20) // max(1, length * hp * 4))   # f32 activation block
        tb = min(tb, act_cap, n)
        if n >= 2:
            tb = min(tb, max(1, -(-n // 2)))                     # leave >=2 grid steps (v7x)
    else:
        tb = max(1, int(batch_block))
    num_blocks = -(-n // tb)
    n_pad = num_blocks * tb

    # ---- wrapper glue (plain JAX): layout, padding, parameter folding ----
    x_nlc = jnp.transpose(x_ncl.astype(jnp.float32), (0, 2, 1))          # (N, L, C)
    x_pad = jnp.pad(x_nlc, ((0, n_pad - n), (pad, pad), (0, 0)))         # (Np, Lp, C)
    x_pad = x_pad.astype(compute_dtype)

    inv_std = jax.lax.rsqrt(bn_var.astype(jnp.float32) + eps)
    scale = bn_gamma.astype(jnp.float32) * inv_std                       # (H,)
    shift = bn_beta.astype(jnp.float32) - bn_mean.astype(jnp.float32) * scale
    shift = jnp.pad(shift, (0, hp - hidden)).reshape(1, hp)

    # conv weight (H, C, K) -> (K, C, H), BN scale folded per output channel
    # in f32, then zero-pad the hidden axis and cast to the compute dtype.
    w_kch = jnp.transpose(conv_w.astype(jnp.float32), (2, 1, 0)) * scale[None, None, :]
    w_kch = jnp.pad(w_kch, ((0, 0), (0, 0), (0, hp - hidden))).astype(compute_dtype)

    wfc = jnp.pad(fc_w.astype(jnp.float32).T,
                  ((0, hp - hidden), (0, ncp - num_classes))).astype(compute_dtype)
    bfc = jnp.pad(fc_b.astype(jnp.float32), (0, ncp - num_classes)).reshape(1, ncp)

    # ---- per-generation VMEM budget (count (8,128) tile padding, 2x pipelined) ----
    x_blk = tb * _round_up(lp, 8) * _round_up(c_in, 128) * itm
    out_blk = _round_up(tb, 8) * ncp * 4
    w_bytes = (ksize * _round_up(c_in, 8) * hp * itm + hp * ncp * itm
               + 8 * hp * 4 + 8 * ncp * 4)
    act_bytes = 2 * _round_up(tb * length, 8) * hp * 4 + _round_up(tb, 8) * hp * 4
    need = 2 * (x_blk + out_blk) + 2 * w_bytes + act_bytes + (4 << 20)
    try:
        cap = int(getattr(pltpu.get_tpu_info(), "vmem_capacity_bytes", 64 << 20))
    except Exception:  # pragma: no cover - conservative fallback
        cap = 64 << 20
    vmem_limit = int(min(max(32 << 20, need), int(cap * 0.85)))

    kernel = functools.partial(_encoder_kernel, ksize=ksize, length=length,
                               inv_len=1.0 / float(length))

    out = pl.pallas_call(
        kernel,
        out_shape=jax.ShapeDtypeStruct((num_blocks, tb, ncp), jnp.float32),
        grid=(num_blocks,),
        in_specs=[
            pl.BlockSpec((tb, lp, c_in), lambda b: (b, 0, 0)),    # per-step varying
            pl.BlockSpec((ksize, c_in, hp), lambda b: (0, 0, 0)),  # grid-invariant
            pl.BlockSpec((1, hp), lambda b: (0, 0)),
            pl.BlockSpec((hp, ncp), lambda b: (0, 0)),
            pl.BlockSpec((1, ncp), lambda b: (0, 0)),
        ],
        out_specs=pl.BlockSpec((1, tb, ncp), lambda b: (b, 0, 0)),
        compiler_params=pltpu.CompilerParams(
            dimension_semantics=("parallel",),
            vmem_limit_bytes=vmem_limit),
    )(x_pad, w_kch, shift, wfc, bfc)

    return out.reshape(n_pad, ncp)[:n, :num_classes]


def _reference(x_ncl, conv_w, bn_gamma, bn_beta, bn_mean, bn_var, fc_w, fc_b,
               eps=1e-5):
    pad = conv_w.shape[2] // 2
    y = jax.lax.conv_general_dilated(
        x_ncl, conv_w, window_strides=(1,), padding=[(pad, pad)],
        dimension_numbers=("NCH", "OIH", "NCH"))
    y = (y - bn_mean[None, :, None]) * jax.lax.rsqrt(bn_var + eps)[None, :, None]
    y = y * bn_gamma[None, :, None] + bn_beta[None, :, None]
    y = jax.nn.silu(y)
    gap = jnp.mean(y, axis=-1)                                    # (N, H)
    return gap @ fc_w.T + fc_b


if __name__ == "__main__":
    # small shapes consistent with the module's forward (N, C_in, L)
    N, C_IN, L = 2, 4, 16
    HIDDEN, KSIZE, NUM_CLASSES = 32, 3, 3

    key = jax.random.PRNGKey(0)
    kx, kw, kg, kb, km, kv, kfw, kfb = jax.random.split(key, 8)

    x = jax.random.normal(kx, (N, C_IN, L), jnp.float32)
    conv_w = 0.1 * jax.random.normal(kw, (HIDDEN, C_IN, KSIZE), jnp.float32)
    bn_gamma = 1.0 + 0.1 * jax.random.normal(kg, (HIDDEN,), jnp.float32)
    bn_beta = 0.1 * jax.random.normal(kb, (HIDDEN,), jnp.float32)
    bn_mean = 0.05 * jax.random.normal(km, (HIDDEN,), jnp.float32)
    bn_var = 0.5 + jnp.abs(jax.random.normal(kv, (HIDDEN,), jnp.float32))
    fc_w = 0.1 * jax.random.normal(kfw, (NUM_CLASSES, HIDDEN), jnp.float32)
    fc_b = 0.1 * jax.random.normal(kfb, (NUM_CLASSES,), jnp.float32)

    out = encoder1d_forward(x, conv_w, bn_gamma, bn_beta, bn_mean, bn_var,
                            fc_w, fc_b)
    jax.block_until_ready(out)

    ref = _reference(x, conv_w, bn_gamma, bn_beta, bn_mean, bn_var, fc_w, fc_b)
    # bf16 inputs/weights with f32 accumulation -> loosened tolerance.
    np.testing.assert_allclose(np.asarray(out), np.asarray(ref),
                               rtol=2e-2, atol=1e-2)
    print("KERNEL_OK")
</pallas_src>

<mosaic_0001>
module attributes {stable_mosaic.version = 11 : i64} {
  func.func @_encoder_kernel(%arg0: i32, %arg1: memref<1x18x4xbf16, #tpu.memory_space<vmem>>, %arg2: memref<3x4x128xbf16, #tpu.memory_space<vmem>>, %arg3: memref<1x128xf32, #tpu.memory_space<vmem>>, %arg4: memref<128x128xbf16, #tpu.memory_space<vmem>>, %arg5: memref<1x128xf32, #tpu.memory_space<vmem>>, %arg6: memref<1x1x128xf32, #tpu.memory_space<vmem>>) attributes {dimension_semantics = [#tpu.dimension_semantics<parallel>], iteration_bounds = array<i64: 2>, scalar_prefetch = 0 : i64, scratch_operands = 0 : i64, tpu.core_type = #tpu.core_type<tc>, window_params = [{transform_indices = @transform_0, window_bounds = array<i64: 1, 18, 4>}, {pipeline_mode = #tpu.pipeline_mode<synchronous>, transform_indices = @transform_1, window_bounds = array<i64: 3, 4, 128>}, {pipeline_mode = #tpu.pipeline_mode<synchronous>, transform_indices = @transform_2, window_bounds = array<i64: 1, 128>}, {pipeline_mode = #tpu.pipeline_mode<synchronous>, transform_indices = @transform_3, window_bounds = array<i64: 128, 128>}, {pipeline_mode = #tpu.pipeline_mode<synchronous>, transform_indices = @transform_4, window_bounds = array<i64: 1, 128>}, {transform_indices = @transform_5, window_bounds = array<i64: 1, 1, 128>}]} {
    %c0 = arith.constant 0 : index
    %c0_0 = arith.constant 0 : index
    %c0_1 = arith.constant 0 : index
    %0 = vector.load %arg1[%c0, %c0_0, %c0_1] : memref<1x18x4xbf16, #tpu.memory_space<vmem>>, vector<1x18x4xbf16>
    %cst = arith.constant 0.000000e+00 : f32
    %1 = vector.broadcast %cst : f32 to vector<16x128xf32>
    %2 = vector.extract_strided_slice %0 {offsets = [0, 0, 0], sizes = [1, 16, 4], strides = [1, 1, 1]} : vector<1x18x4xbf16> to vector<1x16x4xbf16>
    %3 = vector.shape_cast %2 : vector<1x16x4xbf16> to vector<16x4xbf16>
    %c0_2 = arith.constant 0 : index
    %c0_3 = arith.constant 0 : index
    %c0_4 = arith.constant 0 : index
    %4 = vector.load %arg2[%c0_2, %c0_3, %c0_4] : memref<3x4x128xbf16, #tpu.memory_space<vmem>>, vector<1x4x128xbf16>
    %5 = vector.shape_cast %4 : vector<1x4x128xbf16> to vector<4x128xbf16>
    %cst_5 = arith.constant dense<0.000000e+00> : vector<16x128xf32>
    %6 = tpu.matmul %3, %5, %cst_5 {dimension_numbers = #tpu.dot_dimension_numbers<[1], [0], [0], [1], [0, 0, 1, 1], [], []>} : vector<16x4xbf16>, vector<4x128xbf16>, vector<16x128xf32> -> vector<16x128xf32>
    %7 = arith.addf %1, %6 : vector<16x128xf32>
    %8 = vector.extract_strided_slice %0 {offsets = [0, 1, 0], sizes = [1, 16, 4], strides = [1, 1, 1]} : vector<1x18x4xbf16> to vector<1x16x4xbf16>
    %9 = vector.shape_cast %8 : vector<1x16x4xbf16> to vector<16x4xbf16>
    %c1 = arith.constant 1 : index
    %c0_6 = arith.constant 0 : index
    %c0_7 = arith.constant 0 : index
    %10 = vector.load %arg2[%c1, %c0_6, %c0_7] : memref<3x4x128xbf16, #tpu.memory_space<vmem>>, vector<1x4x128xbf16>
    %11 = vector.shape_cast %10 : vector<1x4x128xbf16> to vector<4x128xbf16>
    %cst_8 = arith.constant dense<0.000000e+00> : vector<16x128xf32>
    %12 = tpu.matmul %9, %11, %cst_8 {dimension_numbers = #tpu.dot_dimension_numbers<[1], [0], [0], [1], [0, 0, 1, 1], [], []>} : vector<16x4xbf16>, vector<4x128xbf16>, vector<16x128xf32> -> vector<16x128xf32>
    %13 = arith.addf %7, %12 : vector<16x128xf32>
    %14 = vector.extract_strided_slice %0 {offsets = [0, 2, 0], sizes = [1, 16, 4], strides = [1, 1, 1]} : vector<1x18x4xbf16> to vector<1x16x4xbf16>
    %15 = vector.shape_cast %14 : vector<1x16x4xbf16> to vector<16x4xbf16>
    %c2 = arith.constant 2 : index
    %c0_9 = arith.constant 0 : index
    %c0_10 = arith.constant 0 : index
    %16 = vector.load %arg2[%c2, %c0_9, %c0_10] : memref<3x4x128xbf16, #tpu.memory_space<vmem>>, vector<1x4x128xbf16>
    %17 = vector.shape_cast %16 : vector<1x4x128xbf16> to vector<4x128xbf16>
    %cst_11 = arith.constant dense<0.000000e+00> : vector<16x128xf32>
    %18 = tpu.matmul %15, %17, %cst_11 {dimension_numbers = #tpu.dot_dimension_numbers<[1], [0], [0], [1], [0, 0, 1, 1], [], []>} : vector<16x4xbf16>, vector<4x128xbf16>, vector<16x128xf32> -> vector<16x128xf32>
    %19 = arith.addf %13, %18 : vector<16x128xf32>
    %c0_12 = arith.constant 0 : index
    %c0_13 = arith.constant 0 : index
    %20 = vector.load %arg3[%c0_12, %c0_13] : memref<1x128xf32, #tpu.memory_space<vmem>>, vector<1x128xf32>
    %21 = vector.broadcast %20 : vector<1x128xf32> to vector<16x128xf32>
    %22 = arith.addf %19, %21 : vector<16x128xf32>
    %cst_14 = arith.constant 5.000000e-01 : f32
    %23 = vector.broadcast %cst_14 : f32 to vector<16x128xf32>
    %24 = arith.mulf %23, %22 : vector<16x128xf32>
    %cst_15 = arith.constant 5.000000e-01 : f32
    %25 = vector.broadcast %cst_15 : f32 to vector<16x128xf32>
    %26 = arith.mulf %25, %22 : vector<16x128xf32>
    %27 = math.tanh %26 : vector<16x128xf32>
    %cst_16 = arith.constant 1.000000e+00 : f32
    %28 = vector.broadcast %cst_16 : f32 to vector<16x128xf32>
    %29 = arith.addf %27, %28 : vector<16x128xf32>
    %30 = arith.mulf %24, %29 : vector<16x128xf32>
    %31 = vector.shape_cast %30 : vector<16x128xf32> to vector<1x16x128xf32>
    %cst_17 = arith.constant dense<0.000000e+00> : vector<1x128xf32>
    %32 = vector.multi_reduction <add>, %31, %cst_17 [1] : vector<1x16x128xf32> to vector<1x128xf32>
    %cst_18 = arith.constant 6.250000e-02 : f32
    %33 = vector.broadcast %cst_18 : f32 to vector<1x128xf32>
    %34 = arith.mulf %32, %33 : vector<1x128xf32>
    %35 = arith.truncf %34 : vector<1x128xf32> to vector<1x128xbf16>
    %c0_19 = arith.constant 0 : index
    %c0_20 = arith.constant 0 : index
    %36 = vector.load %arg4[%c0_19, %c0_20] : memref<128x128xbf16, #tpu.memory_space<vmem>>, vector<128x128xbf16>
    %cst_21 = arith.constant dense<0.000000e+00> : vector<1x128xf32>
    %37 = tpu.matmul %35, %36, %cst_21 {dimension_numbers = #tpu.dot_dimension_numbers<[1], [0], [0], [1], [0, 0, 1, 1], [], []>} : vector<1x128xbf16>, vector<128x128xbf16>, vector<1x128xf32> -> vector<1x128xf32>
    %c0_22 = arith.constant 0 : index
    %c0_23 = arith.constant 0 : index
    %38 = vector.load %arg5[%c0_22, %c0_23] : memref<1x128xf32, #tpu.memory_space<vmem>>, vector<1x128xf32>
    %39 = arith.addf %37, %38 : vector<1x128xf32>
    %c0_24 = arith.constant 0 : index
    %c0_25 = arith.constant 0 : index
    %c0_26 = arith.constant 0 : index
    %40 = vector.load %arg6[%c0_24, %c0_25, %c0_26] : memref<1x1x128xf32, #tpu.memory_space<vmem>>, vector<1x1x128xf32>
    %41 = vector.shape_cast %40 : vector<1x1x128xf32> to vector<1x128xf32>
    %42 = vector.shape_cast %39 : vector<1x128xf32> to vector<1x1x128xf32>
    tpu.vector_store %arg6[%c0_24, %c0_25, %c0_26], %42 {strides = array<i32>} : memref<1x1x128xf32, #tpu.memory_space<vmem>>, vector<1x1x128xf32>,
    return
  }
  func.func @transform_0(%arg0: i32) -> (i32, i32, i32) {
    %c0_i32 = arith.constant 0 : i32
    %c0_i32_0 = arith.constant 0 : i32
    %c0_i32_1 = arith.constant 0 : i32
    return %arg0, %c0_i32, %c0_i32_0 : i32, i32, i32
  }
  func.func @transform_1(%arg0: i32) -> (i32, i32, i32) {
    %c0_i32 = arith.constant 0 : i32
    %c0_i32_0 = arith.constant 0 : i32
    %c0_i32_1 = arith.constant 0 : i32
    %c0_i32_2 = arith.constant 0 : i32
    return %c0_i32, %c0_i32_0, %c0_i32_1 : i32, i32, i32
  }
  func.func @transform_2(%arg0: i32) -> (i32, i32) {
    %c0_i32 = arith.constant 0 : i32
    %c0_i32_0 = arith.constant 0 : i32
    %c0_i32_1 = arith.constant 0 : i32
    return %c0_i32, %c0_i32_0 : i32, i32
  }
  func.func @transform_3(%arg0: i32) -> (i32, i32) {
    %c0_i32 = arith.constant 0 : i32
    %c0_i32_0 = arith.constant 0 : i32
    %c0_i32_1 = arith.constant 0 : i32
    return %c0_i32, %c0_i32_0 : i32, i32
  }
  func.func @transform_4(%arg0: i32) -> (i32, i32) {
    %c0_i32 = arith.constant 0 : i32
    %c0_i32_0 = arith.constant 0 : i32
    %c0_i32_1 = arith.constant 0 : i32
    return %c0_i32, %c0_i32_0 : i32, i32
  }
  func.func @transform_5(%arg0: i32) -> (i32, i32, i32) {
    %c0_i32 = arith.constant 0 : i32
    %c0_i32_0 = arith.constant 0 : i32
    %c0_i32_1 = arith.constant 0 : i32
    return %arg0, %c0_i32, %c0_i32_0 : i32, i32, i32
  }
}

</mosaic_0001>

<llo_original>
// kernel: tpu_custom_call.1
$region0: #{tpu_custom_call.1}
  #allocation0 [shape = 'u32[]', space=smem, size = 0x4, offset = 0x4, fixed_abs, tag = 'smem constant byte address 0x4 - core index']
  #allocation1 [shape = 'u32[144,128]{1,0:T(1,128)}', space=vmem, size = 0x12000, scoped, tag = 'internal scratch']
  %s0 = inlined_call_operand.vmem [shape: bf16[2,18,4], index: 0, kind: input, shape index: {}]
  %s1 = inlined_call_operand.vmem [shape: bf16[3,4,128], index: 1, kind: input, shape index: {}]
  %s2 = inlined_call_operand.vmem [shape: f32[1,128], index: 2, kind: input, shape index: {}]
  %s3 = inlined_call_operand.hbm [shape: bf16[128,128], index: 3, kind: input, shape index: {}]
  %s4 = inlined_call_operand.vmem [shape: f32[1,128], index: 4, kind: input, shape index: {}]
  %s5 = inlined_call_operand.hbm [shape: f32[2,1,128], index: 5, kind: output, shape index: {}]
  %s6 = sld [smem:[#allocation0]]
  $region57: #{tpu_custom_call.1} parent=0
    _
  %s8 = ssub.s32 1, %s6
  %s9 = scalar_select 0, %s8, %s6
  $region1: #{tpu_custom_call.1} parent=0
    #allocation2 [shape = 'u8[32768]{0}', space=vmem, size = 0x8000, scoped, tag = 'input window, operand 3, single buffered']
    #allocation3 [shape = 's32[2]{0}', space=sflag, size = 0x8, scoped, tag = 'scoped memory for tpu_custom_call.1']
    #allocation4 [shape = 's32[2]{0}', space=sflag, size = 0x8, scoped, tag = 'scoped memory for tpu_custom_call.1']
    #allocation5 [shape = 'u8[1024]{0}', space=vmem, size = 0x400, scoped, tag = 'output window, operand 0']
    %10 = vsyncpa [#allocation3], 0
    %11 = vsyncpa [#allocation4], 0
    %s12 = scalar_lea.sflag [#allocation4], 1
    %13 = vsyncpa %s12, 0
    loop: start=0, step=1, limit=4
    $region2: #{tpu_custom_call.1} parent=1 // loop_pre_header
      _
    $region3: #{tpu_custom_call.1} parent=1 // loop_header
      %s15 = sphi 0, %s19
      %p16 = scmp.ge.s32.totalorder %s15, 4
      %s25 = sphi 0, %s27
      %s28 = sphi 0, %s25
      %s29 = sphi 0, %s28
      %s45 = sphi 0, %s29
      %s49 = sphi 0, %s49
      %s51 = sphi 0, %s49
      %s52 = sphi 0, %s51
      %s66 = sphi 0, %s52
      %s70 = sphi 0, %s70
      %s72 = sphi 0, %s70
      %s73 = sphi 0, %s72
      %s87 = sphi 0, %s73
      %s91 = sphi 0, %s91
      %s93 = sphi 0, %s91
      %s94 = sphi 0, %s93
      %s108 = sphi 0, %s94
      %s112 = sphi 0, %s112
      %s114 = sphi 0, %s112
      %s115 = sphi 0, %s114
      %s129 = sphi 0, %s115
      %s135 = sphi 0, %s137
      %s138 = sphi 0, %s135
      %s139 = sphi 0, %s138
      %s155 = sphi 0, %s139
    $region4: #{tpu_custom_call.1} parent=1 // loop_header_branch
      %18 = sbr.rel (%p16) target = $region8
    $region5: #{tpu_custom_call.1} parent=1 // loop_body
      %s20 = ssub.s32 %s15, 1
      %s21 = ssub.s32 %s15, 2
      %s22 = sadd.s32 %s15, 1
      %s23 = ssub.s32 %s15, %s22
      %p24 = scmp.eq.s32.totalorder %s23, 0
      %s26 = sadd.s32 %s25, 1
      %s27 = scalar_select %p24, %s25, %s26
      %p30 = pneg %p24
      %p31 = scmp.eq.s32.totalorder %s15, 1
      %p32 = por %p30, %p31
      %p33 = scmp.ne.s32.totalorder %s25, %s28
      %p34 = scmp.eq.s32.totalorder %s15, 0
      %p35 = por %p33, %p34
      %p36 = scmp.ne.s32.totalorder %s25, %s28
      %p37 = scmp.eq.s32.totalorder %s20, 1
      %p38 = por %p36, %p37
      %p39 = scmp.ne.s32.totalorder %s28, %s29
      %p40 = scmp.eq.s32.totalorder %s20, 0
      %p41 = por %p39, %p40
      %p42 = scmp.ne.s32.totalorder %s28, %s29
      %p43 = scmp.eq.s32.totalorder %s21, 1
      %p44 = por %p42, %p43
      %p46 = scmp.ne.s32.totalorder %s29, %s45
      %p47 = scmp.eq.s32.totalorder %s21, 0
      %p48 = por %p46, %p47
      %s50 = sadd.s32 %s49, 1
      %p53 = scmp.eq.s32.totalorder %s15, 1
      %p54 = scmp.ne.s32.totalorder %s49, %s51
      %p55 = scmp.eq.s32.totalorder %s15, 0
      %p56 = por %p54, %p55
      %p57 = scmp.ne.s32.totalorder %s49, %s51
      %p58 = scmp.eq.s32.totalorder %s20, 1
      %p59 = por %p57, %p58
      %p60 = scmp.ne.s32.totalorder %s51, %s52
      %p61 = scmp.eq.s32.totalorder %s20, 0
      %p62 = por %p60, %p61
      %p63 = scmp.ne.s32.totalorder %s51, %s52
      %p64 = scmp.eq.s32.totalorder %s21, 1
      %p65 = por %p63, %p64
      %p67 = scmp.ne.s32.totalorder %s52, %s66
      %p68 = scmp.eq.s32.totalorder %s21, 0
      %p69 = por %p67, %p68
      %s71 = sadd.s32 %s70, 1
      %p74 = scmp.eq.s32.totalorder %s15, 1
      %p75 = scmp.ne.s32.totalorder %s70, %s72
      %p76 = scmp.eq.s32.totalorder %s15, 0
      %p77 = por %p75, %p76
      %p78 = scmp.ne.s32.totalorder %s70, %s72
      %p79 = scmp.eq.s32.totalorder %s20, 1
      %p80 = por %p78, %p79
      %p81 = scmp.ne.s32.totalorder %s72, %s73
      %p82 = scmp.eq.s32.totalorder %s20, 0
      %p83 = por %p81, %p82
      %p84 = scmp.ne.s32.totalorder %s72, %s73
      %p85 = scmp.eq.s32.totalorder %s21, 1
      %p86 = por %p84, %p85
      %p88 = scmp.ne.s32.totalorder %s73, %s87
      %p89 = scmp.eq.s32.totalorder %s21, 0
      %p90 = por %p88, %p89
      %s92 = sadd.s32 %s91, 1
      %p95 = scmp.eq.s32.totalorder %s15, 1
      %p96 = scmp.ne.s32.totalorder %s91, %s93
      %p97 = scmp.eq.s32.totalorder %s15, 0
      %p98 = por %p96, %p97
      %p99 = scmp.ne.s32.totalorder %s91, %s93
      %p100 = scmp.eq.s32.totalorder %s20, 1
      %p101 = por %p99, %p100
      %p102 = scmp.ne.s32.totalorder %s93, %s94
      %p103 = scmp.eq.s32.totalorder %s20, 0
      %p104 = por %p102, %p103
      %p105 = scmp.ne.s32.totalorder %s93, %s94
      %p106 = scmp.eq.s32.totalorder %s21, 1
      %p107 = por %p105, %p106
      %p109 = scmp.ne.s32.totalorder %s94, %s108
      %p110 = scmp.eq.s32.totalorder %s21, 0
      %p111 = por %p109, %p110
      %s113 = sadd.s32 %s112, 1
      %p116 = scmp.eq.s32.totalorder %s15, 1
      %p117 = scmp.ne.s32.totalorder %s112, %s114
      %p118 = scmp.eq.s32.totalorder %s15, 0
      %p119 = por %p117, %p118
      %p120 = scmp.ne.s32.totalorder %s112, %s114
      %p121 = scmp.eq.s32.totalorder %s20, 1
      %p122 = por %p120, %p121
      %p123 = scmp.ne.s32.totalorder %s114, %s115
      %p124 = scmp.eq.s32.totalorder %s20, 0
      %p125 = por %p123, %p124
      %p126 = scmp.ne.s32.totalorder %s114, %s115
      %p127 = scmp.eq.s32.totalorder %s21, 1
      %p128 = por %p126, %p127
      %p130 = scmp.ne.s32.totalorder %s115, %s129
      %p131 = scmp.eq.s32.totalorder %s21, 0
      %p132 = por %p130, %p131
      %s133 = ssub.s32 %s15, %s22
      %p134 = scmp.eq.s32.totalorder %s133, 0
      %s136 = sadd.s32 %s135, 1
      %s137 = scalar_select %p134, %s135, %s136
      %p140 = pneg %p134
      %p141 = scmp.eq.s32.totalorder %s15, 1
      %p142 = por %p140, %p141
      %p143 = scmp.ne.s32.totalorder %s135, %s138
      %p144 = scmp.eq.s32.totalorder %s15, 0
      %p145 = por %p143, %p144
      %p146 = scmp.ne.s32.totalorder %s135, %s138
      %p147 = scmp.eq.s32.totalorder %s20, 1
      %p148 = por %p146, %p147
      %p149 = scmp.ne.s32.totalorder %s138, %s139
      %p150 = scmp.eq.s32.totalorder %s20, 0
      %p151 = por %p149, %p150
      %p152 = scmp.ne.s32.totalorder %s138, %s139
      %p153 = scmp.eq.s32.totalorder %s21, 1
      %p154 = por %p152, %p153
      %p156 = scmp.ne.s32.totalorder %s139, %s155
      %p157 = scmp.eq.s32.totalorder %s21, 0
      %p158 = por %p156, %p157
      %p159 = scmp.le.s32.totalorder 1, %s15
      %p160 = scmp.lt.s32.totalorder %s15, 3
      %p161 = pnand %p159, %p160
      %p162 = pneg %p161
      // Predicated region
      $region9: #{tpu_custom_call.1} parent=5 // pred_check
        _
      $region10: #{tpu_custom_call.1} parent=5 // pred_check_branch
        %164 = sbr.rel (%p161) target = $region12
      $region11: #{tpu_custom_call.1} parent=5 // pred_region
        %s165 = ssub.s32 %s15, 1
        // Predicated region
        $region13: #{tpu_custom_call.1} parent=11 // pred_check
          %p166 = pneg %p62
        $region14: #{tpu_custom_call.1} parent=11 // pred_check_branch
          %168 = sbr.rel (%p166) target = $region16
        $region15: #{tpu_custom_call.1} parent=11 // pred_region
          _
        $region16: #{tpu_custom_call.1} parent=11 // pred_fallthru
          _
        // Predicated region
        $region17: #{tpu_custom_call.1} parent=11 // pred_check
          %p169 = pneg %p83
        $region18: #{tpu_custom_call.1} parent=11 // pred_check_branch
          %171 = sbr.rel (%p169) target = $region20
        $region19: #{tpu_custom_call.1} parent=11 // pred_region
          _
        $region20: #{tpu_custom_call.1} parent=11 // pred_fallthru
          _
        // Predicated region
        $region21: #{tpu_custom_call.1} parent=11 // pred_check
          %p172 = pneg %p104
        $region22: #{tpu_custom_call.1} parent=11 // pred_check_branch
          %174 = sbr.rel (%p172) target = $region24
        $region23: #{tpu_custom_call.1} parent=11 // pred_region
          %s176 = ssub.s32 1024, 1024
          %177 = vsyncadd [#allocation3], %s176
          %s178 = sshll.u32 [#allocation2], 4
          %s179 = int_to_ptr.vmem [resolvable:$true] %s178
          %184 = dma.hbm_to_vmem [thread:$0]  %s3, 1024, %s179, [#allocation3], 64, 64, 4
        $region24: #{tpu_custom_call.1} parent=11 // pred_fallthru
          _
        // Predicated region
        $region25: #{tpu_custom_call.1} parent=11 // pred_check
          %p185 = pneg %p125
        $region26: #{tpu_custom_call.1} parent=11 // pred_check_branch
          %187 = sbr.rel (%p185) target = $region28
        $region27: #{tpu_custom_call.1} parent=11 // pred_region
          _
        $region28: #{tpu_custom_call.1} parent=11 // pred_fallthru
          _
      $region12: #{tpu_custom_call.1} parent=5 // pred_fallthru
        _
      %p188 = scmp.lt.s32.totalorder %s15, 2
      // Predicated region
      $region29: #{tpu_custom_call.1} parent=5 // pred_check
        %p189 = pneg %p188
      $region30: #{tpu_custom_call.1} parent=5 // pred_check_branch
        %191 = sbr.rel (%p189) target = $region32
      $region31: #{tpu_custom_call.1} parent=5 // pred_region
        // Predicated region
        $region33: #{tpu_custom_call.1} parent=31 // pred_check
          %p192 = pneg %p35
        $region34: #{tpu_custom_call.1} parent=31 // pred_check_branch
          %194 = sbr.rel (%p192) target = $region36
        $region35: #{tpu_custom_call.1} parent=31 // pred_region
          %p195 = scmp.lt.s32.totalorder %s15, 1
          %s196 = scalar_select %p195, %s15, 1
          %s197 = smul.addr %s196, 3
          %s198 = smul.addr %s197, 4
          %s199 = scalar_lea.vmem %s0, %s198
        $region36: #{tpu_custom_call.1} parent=31 // pred_fallthru
          _
      $region32: #{tpu_custom_call.1} parent=5 // pred_fallthru
        _
      %p200 = scmp.le.s32.totalorder 1, %s15
      %p201 = scmp.lt.s32.totalorder %s15, 3
      %p202 = pnand %p200, %p201
      %p203 = pneg %p202
      // Predicated region
      $region37: #{tpu_custom_call.1} parent=5 // pred_check
        _
      $region38: #{tpu_custom_call.1} parent=5 // pred_check_branch
        %205 = sbr.rel (%p202) target = $region40
      $region39: #{tpu_custom_call.1} parent=5 // pred_region
        %s206 = ssub.s32 %s15, 1
        // Predicated region
        $region41: #{tpu_custom_call.1} parent=39 // pred_check
          %p207 = pneg %p104
        $region42: #{tpu_custom_call.1} parent=39 // pred_check_branch
          %209 = sbr.rel (%p207) target = $region44
        $region43: #{tpu_custom_call.1} parent=39 // pred_region
          %210 = dma.done [#allocation3], 1024
        $region44: #{tpu_custom_call.1} parent=39 // pred_fallthru
          _
        %p211 = scmp.lt.s32.totalorder %s20, 1
        %s212 = scalar_select %p211, %s20, 1
        %s213 = smul.addr %s212, 3
        %s214 = smul.addr %s213, 4
        %s215 = scalar_lea.vmem %s0, %s214
        %p216 = pneg %p41
        %p217 = pneg %p38
        %p218 = pneg %p62
        %p219 = pneg %p59
        %p220 = pneg %p83
        %p221 = pneg %p80
        %p222 = pneg %p104
        %p223 = pneg %p101
        %p224 = pneg %p125
        %p225 = pneg %p122
        %p226 = pneg %p151
        %p227 = pneg %p148
        %s228 = sand.u32 %s138, 1
        %s229 = scalar_lea.sflag [#allocation4], %s228
        %s230 = sand.u32 %s138, 1
        %s231 = scalar_lea.vmem [#allocation5], %s230
        %p232 = scmp.lt.s32.totalorder %s20, 1
        %s233 = scalar_select %p232, %s20, 1
        %s234 = smul.addr %s233, 3
        %s235 = smul.addr %s234, 4
        %s236 = scalar_lea.vmem %s0, %s235
        %v238 = vld [vmem:[%s236] sm:$0xf]
        %v239 = vld [vmem:[%s236 + $0x4] sm:$0xf]
        %v240 = vld [vmem:[%s236 + $0x8] sm:$0x1]
        %v241 = vld [vmem:[%s1] sm:$0x3]
        %s242 = scalar_lea.vmem %s1, 2
        %v243 = vld [vmem:[%s242] sm:$0x3]
        %v247 = vunpack.c.l.b16 %v238
        %v248 = vunpack.c.l.b16 %v239
        %v249 = vunpack.c.l.b16 %v240
        %v250 = vpack.c.b16 %v248, %v247
        %v251 = vpack.c.b16 %v249, %v249
        %vm252 = vsmask.f32 7424
        %v254 = vshrl.u32 %v250, 16
        %v256 = vshll.u32 %v250, 16
        %v258 = vrot.slane %v256, 1
        %v259 = vor.u32 %v254, %v258
        %v261 = vshll.u32 %v251, 16
        %v263 = vrot.slane %v261, 1
        %v264 = vsel %vm252, %v259, %v263
        %vm265 = vcmask 31744
        %v267 = vsel %vm265, %v264, 0
        %vm269 = vcmask 1041408
        %v271 = vsel %vm269, %v243, 0
        %273 = vmatprep.subr.bf16.mxu0 0
        %274 = vmatpush1.bf16.msra.mxu0 %v271
        %275 = vmatprep.subr.bf16.mxu0 0
        %276 = vmatpush1.bf16.msra.mxu0 0
        %277 = vmatprep.subr.bf16.mxu0 0
        %278 = vmatpush1.bf16.msra.mxu0 0
        %279 = vmatprep.subr.bf16.mxu0 0
        %280 = vmatpush1.bf16.msra.mxu0 0
        %281 = vmatprep.subr.bf16.mxu0 0
        %282 = vmatpush1.bf16.msra.mxu0 0
        %283 = vmatprep.subr.bf16.mxu0 0
        %284 = vmatpush1.bf16.msra.mxu0 0
        %285 = vmatprep.subr.bf16.mxu0 0
        %286 = vmatpush1.bf16.msra.mxu0 0
        %287 = vmatprep.subr.bf16.mxu0 0
        %288 = vmatpush1.bf16.msra.mxu0 0
        %289 = vmatprep.subr.bf16.mxu0 0
        %290 = vmatpush1.bf16.msra.mxu0 0
        %291 = vmatprep.subr.bf16.mxu0 0
        %292 = vmatpush1.bf16.msra.mxu0 0
        %293 = vmatprep.subr.bf16.mxu0 0
        %294 = vmatpush1.bf16.msra.mxu0 0
        %295 = vmatprep.subr.bf16.mxu0 0
        %296 = vmatpush1.bf16.msra.mxu0 0
        %297 = vmatprep.subr.bf16.mxu0 0
        %298 = vmatpush1.bf16.msra.mxu0 0
        %299 = vmatprep.subr.bf16.mxu0 0
        %300 = vmatpush1.bf16.msra.mxu0 0
        %301 = vmatprep.subr.bf16.mxu0 0
        %302 = vmatpush1.bf16.msra.mxu0 0
        %303 = vmatprep.subr.bf16.mxu0 0
        %304 = vmatpush1.bf16.msra.mxu0 0
        %305 = vmatprep.mubr.bf16.mxu0 0
        %306 = vmatmul.mubr.bf16.gmra.mrb[0].mxu0 %v267
        %v307 = vpop.f32.mrb[0].mxu0
        %v308 = vadd.f32 0.0, %v307
        %v309 = vpop.f32.mrb[0].mxu0
        %v310 = vpop.f32.mrb[0].mxu0
        %v311 = vadd.f32 0.0, %v310
        %v312 = vpop.f32.mrb[0].mxu0
        %313 = vdwg.mxu0
        %v314 = vsel %vm265, %v250, 0
        %v317 = vsel %vm269, %v241, 0
        %319 = vmatprep.subr.bf16.mxu0 0
        %320 = vmatpush1.bf16.msra.mxu0 %v317
        %321 = vmatprep.subr.bf16.mxu0 0
        %322 = vmatpush1.bf16.msra.mxu0 0
        %323 = vmatprep.subr.bf16.mxu0 0
        %324 = vmatpush1.bf16.msra.mxu0 0
        %325 = vmatprep.subr.bf16.mxu0 0
        %326 = vmatpush1.bf16.msra.mxu0 0
        %327 = vmatprep.subr.bf16.mxu0 0
        %328 = vmatpush1.bf16.msra.mxu0 0
        %329 = vmatprep.subr.bf16.mxu0 0
        %330 = vmatpush1.bf16.msra.mxu0 0
        %331 = vmatprep.subr.bf16.mxu0 0
        %332 = vmatpush1.bf16.msra.mxu0 0
        %333 = vmatprep.subr.bf16.mxu0 0
        %334 = vmatpush1.bf16.msra.mxu0 0
        %335 = vmatprep.subr.bf16.mxu0 0
        %336 = vmatpush1.bf16.msra.mxu0 0
        %337 = vmatprep.subr.bf16.mxu0 0
        %338 = vmatpush1.bf16.msra.mxu0 0
        %339 = vmatprep.subr.bf16.mxu0 0
        %340 = vmatpush1.bf16.msra.mxu0 0
        %341 = vmatprep.subr.bf16.mxu0 0
        %342 = vmatpush1.bf16.msra.mxu0 0
        %343 = vmatprep.subr.bf16.mxu0 0
        %344 = vmatpush1.bf16.msra.mxu0 0
        %345 = vmatprep.subr.bf16.mxu0 0
        %346 = vmatpush1.bf16.msra.mxu0 0
        %347 = vmatprep.subr.bf16.mxu0 0
        %348 = vmatpush1.bf16.msra.mxu0 0
        %349 = vmatprep.subr.bf16.mxu0 0
        %350 = vmatpush1.bf16.msra.mxu0 0
        %351 = vmatprep.mubr.bf16.mxu0 0
        %352 = vmatmul.mubr.bf16.gmra.mrb[0].mxu0 %v314
        %v353 = vpop.f32.mrb[0].mxu0
        %v354 = vadd.f32 %v308, %v353
        %v355 = vpop.f32.mrb[0].mxu0
        %v356 = vpop.f32.mrb[0].mxu0
        %v357 = vadd.f32 %v311, %v356
        %v358 = vpop.f32.mrb[0].mxu0
        %359 = vdwg.mxu0
        %s360 = scalar_lea.vmem %s1, 4
        %v361 = vld [vmem:[%s360] sm:$0x3]
        %vm362 = vcmask 1046528
        %v363 = vrot.slane %v250, 1
        %v364 = vrot.slane %v251, 1
        %v365 = vsel %vm362, %v363, %v364
        %v367 = vsel %vm265, %v365, 0
        %v370 = vsel %vm269, %v361, 0
        %372 = vmatprep.subr.bf16.mxu0 0
        %373 = vmatpush1.bf16.msra.mxu0 %v370
        %374 = vmatprep.subr.bf16.mxu0 0
        %375 = vmatpush1.bf16.msra.mxu0 0
        %376 = vmatprep.subr.bf16.mxu0 0
        %377 = vmatpush1.bf16.msra.mxu0 0
        %378 = vmatprep.subr.bf16.mxu0 0
        %379 = vmatpush1.bf16.msra.mxu0 0
        %380 = vmatprep.subr.bf16.mxu0 0
        %381 = vmatpush1.bf16.msra.mxu0 0
        %382 = vmatprep.subr.bf16.mxu0 0
        %383 = vmatpush1.bf16.msra.mxu0 0
        %384 = vmatprep.subr.bf16.mxu0 0
        %385 = vmatpush1.bf16.msra.mxu0 0
        %386 = vmatprep.subr.bf16.mxu0 0
        %387 = vmatpush1.bf16.msra.mxu0 0
        %388 = vmatprep.subr.bf16.mxu0 0
        %389 = vmatpush1.bf16.msra.mxu0 0
        %390 = vmatprep.subr.bf16.mxu0 0
        %391 = vmatpush1.bf16.msra.mxu0 0
        %392 = vmatprep.subr.bf16.mxu0 0
        %393 = vmatpush1.bf16.msra.mxu0 0
        %394 = vmatprep.subr.bf16.mxu0 0
        %395 = vmatpush1.bf16.msra.mxu0 0
        %396 = vmatprep.subr.bf16.mxu0 0
        %397 = vmatpush1.bf16.msra.mxu0 0
        %398 = vmatprep.subr.bf16.mxu0 0
        %399 = vmatpush1.bf16.msra.mxu0 0
        %400 = vmatprep.subr.bf16.mxu0 0
        %401 = vmatpush1.bf16.msra.mxu0 0
        %402 = vmatprep.subr.bf16.mxu0 0
        %403 = vmatpush1.bf16.msra.mxu0 0
        %404 = vmatprep.mubr.bf16.mxu0 0
        %405 = vmatmul.mubr.bf16.gmra.mrb[0].mxu0 %v367
        %v406 = vpop.f32.mrb[0].mxu0
        %v407 = vadd.f32 0.0, %v406
        %v408 = vpop.f32.mrb[0].mxu0
        %v409 = vpop.f32.mrb[0].mxu0
        %v410 = vadd.f32 0.0, %v409
        %v411 = vpop.f32.mrb[0].mxu0
        %412 = vdwg.mxu0
        %v413 = vadd.f32 %v354, %v407
        %v414 = vadd.f32 %v357, %v410
        %v415 = vld [vmem:[%s2] sm:$0x1]
        %v417 = vlaneseq
        %v418 = vshrl.u32 %v417, 7
        %v419 = vsub.s32 0, %v418
        %v420 = vrot.slane %v415, %v419
        %v422 = vadd.f32 %v413, %v420
        %v423 = vadd.f32 %v414, %v420
        %v424 = vmul.f32 %v422, 0.5
        %v425 = vmul.f32 %v423, 0.5
        %v426 = vtanh.pop %v424
        %v427 = vtanh.pop %v425
        %v428 = vadd.f32 %v426, 1.0
        %v429 = vadd.f32 %v427, 1.0
        %v430 = vmul.f32 %v424, %v428
        %v431 = vmul.f32 %v425, %v429
        %v432 = vadd.f32 %v430, %v431
        %v433 = vrot.slane %v432, 4
        %v434 = vadd.f32 %v432, %v433
        %v435 = vrot.slane %v434, 2
        %v436 = vadd.f32 %v434, %v435
        %v437 = vrot.slane %v436, 1
        %v438 = vadd.f32 %v436, %v437
        %v439 = vmul.f32 %v438, 0.0625
        %v440 = vpack.c.bf16 %v439, %v439
        %v441 = vld [vmem:[#allocation2] sm:$0xf]
        %v442 = vld [vmem:[#allocation2 + $0x4] sm:$0xf]
        %v443 = vld [vmem:[#allocation2 + $0x8] sm:$0xf]
        %v444 = vld [vmem:[#allocation2 + $0xc] sm:$0xf]
        %v445 = vld [vmem:[#allocation2 + $0x10] sm:$0xf]
        %v446 = vld [vmem:[#allocation2 + $0x14] sm:$0xf]
        %v447 = vld [vmem:[#allocation2 + $0x18] sm:$0xf]
        %v448 = vld [vmem:[#allocation2 + $0x1c] sm:$0xf]
        %v449 = vld [vmem:[#allocation2 + $0x20] sm:$0xf]
        %v450 = vld [vmem:[#allocation2 + $0x24] sm:$0xf]
        %v451 = vld [vmem:[#allocation2 + $0x28] sm:$0xf]
        %v452 = vld [vmem:[#allocation2 + $0x2c] sm:$0xf]
        %v453 = vld [vmem:[#allocation2 + $0x30] sm:$0xf]
        %v454 = vld [vmem:[#allocation2 + $0x34] sm:$0xf]
        %v455 = vld [vmem:[#allocation2 + $0x38] sm:$0xf]
        %v456 = vld [vmem:[#allocation2 + $0x3c] sm:$0xf]
        %v457 = vld [vmem:[%s4] sm:$0x1]
        %v474 = vunpack.c.l.b16 %v441
        %v475 = vunpack.c.l.b16 %v442
        %v476 = vunpack.c.l.b16 %v443
        %v477 = vunpack.c.l.b16 %v444
        %v478 = vunpack.c.l.b16 %v445
        %v479 = vunpack.c.l.b16 %v446
        %v480 = vunpack.c.l.b16 %v447
        %v481 = vunpack.c.l.b16 %v448
        %v482 = vunpack.c.l.b16 %v449
        %v483 = vunpack.c.l.b16 %v450
        %v484 = vunpack.c.l.b16 %v451
        %v485 = vunpack.c.l.b16 %v452
        %v486 = vunpack.c.l.b16 %v453
        %v487 = vunpack.c.l.b16 %v454
        %v488 = vunpack.c.l.b16 %v455
        %v489 = vunpack.c.l.b16 %v456
        %v490 = vpack.c.b16 %v475, %v474
        %v491 = vpack.c.b16 %v477, %v476
        %v492 = vpack.c.b16 %v479, %v478
        %v493 = vpack.c.b16 %v481, %v480
        %v494 = vpack.c.b16 %v483, %v482
        %v495 = vpack.c.b16 %v485, %v484
        %v496 = vpack.c.b16 %v487, %v486
        %v497 = vpack.c.b16 %v489, %v488
        %506 = vmatprep.subr.bf16.mxu0 0
        %507 = vmatpush1.bf16.msra.mxu0 %v490
        %508 = vmatprep.subr.bf16.mxu0 0
        %509 = vmatpush1.bf16.msra.mxu0 %v491
        %510 = vmatprep.subr.bf16.mxu0 0
        %511 = vmatpush1.bf16.msra.mxu0 %v492
        %512 = vmatprep.subr.bf16.mxu0 0
        %513 = vmatpush1.bf16.msra.mxu0 %v493
        %514 = vmatprep.subr.bf16.mxu0 0
        %515 = vmatpush1.bf16.msra.mxu0 %v494
        %516 = vmatprep.subr.bf16.mxu0 0
        %517 = vmatpush1.bf16.msra.mxu0 %v495
        %518 = vmatprep.subr.bf16.mxu0 0
        %519 = vmatpush1.bf16.msra.mxu0 %v496
        %520 = vmatprep.subr.bf16.mxu0 0
        %521 = vmatpush1.bf16.msra.mxu0 %v497
        %522 = vmatprep.subr.bf16.mxu0 0
        %523 = vmatpush1.bf16.msra.mxu0 0
        %524 = vmatprep.subr.bf16.mxu0 0
        %525 = vmatpush1.bf16.msra.mxu0 0
        %526 = vmatprep.subr.bf16.mxu0 0
        %527 = vmatpush1.bf16.msra.mxu0 0
        %528 = vmatprep.subr.bf16.mxu0 0
        %529 = vmatpush1.bf16.msra.mxu0 0
        %530 = vmatprep.subr.bf16.mxu0 0
        %531 = vmatpush1.bf16.msra.mxu0 0
        %532 = vmatprep.subr.bf16.mxu0 0
        %533 = vmatpush1.bf16.msra.mxu0 0
        %534 = vmatprep.subr.bf16.mxu0 0
        %535 = vmatpush1.bf16.msra.mxu0 0
        %536 = vmatprep.subr.bf16.mxu0 0
        %537 = vmatpush1.bf16.msra.mxu0 0
        %538 = vmatprep.mubr.bf16.mxu0 0
        %539 = vmatmul.mubr.bf16.gmra.mrb[0].mxu0 %v440
        %v540 = vpop.f32.mrb[0].mxu0
        %v541 = vadd.f32 %v457, %v540
        %v542 = vpop.f32.mrb[0].mxu0
        %v543 = vpop.f32.mrb[0].mxu0
        %v544 = vpop.f32.mrb[0].mxu0
        %545 = vdwg.mxu0
        %546 = vst [vmem:[%s231] sm:$0x1] %v541
        %s547 = sand.u32 %s138, 1
        %s548 = scalar_lea.sflag [#allocation4], %s547
        %s549 = sand.u32 %s138, 1
        %s550 = scalar_lea.vmem [#allocation5], %s549
        // Predicated region
        $region45: #{tpu_custom_call.1} parent=39 // pred_check
          %p551 = pneg %p148
        $region46: #{tpu_custom_call.1} parent=39 // pred_check_branch
          %553 = sbr.rel (%p551) target = $region48
        $region47: #{tpu_custom_call.1} parent=39 // pred_region
          %s555 = ssub.s32 16, 16
          %556 = vsyncadd %s548, %s555
          %s557 = smul.addr %s20, 16
          %s558 = scalar_lea.hbm %s5, %s557
          %s560 = sshll.u32 %s550, 4
          %s561 = int_to_ptr.vmem [resolvable:$true] %s560
          %563 = dma.vmem_to_hbm [thread:$0]  %s561, 16, %s558, %s548
        $region48: #{tpu_custom_call.1} parent=39 // pred_fallthru
          _
      $region40: #{tpu_custom_call.1} parent=5 // pred_fallthru
        _
      %p564 = scmp.le.s32.totalorder 2, %s15
      // Predicated region
      $region49: #{tpu_custom_call.1} parent=5 // pred_check
        %p565 = pneg %p564
      $region50: #{tpu_custom_call.1} parent=5 // pred_check_branch
        %567 = sbr.rel (%p565) target = $region52
      $region51: #{tpu_custom_call.1} parent=5 // pred_region
        %s568 = ssub.s32 %s15, 2
        // Predicated region
        $region53: #{tpu_custom_call.1} parent=51 // pred_check
          %p569 = pneg %p154
        $region54: #{tpu_custom_call.1} parent=51 // pred_check_branch
          %571 = sbr.rel (%p569) target = $region56
        $region55: #{tpu_custom_call.1} parent=51 // pred_region
          %s572 = sand.u32 %s139, 1
          %s573 = scalar_lea.sflag [#allocation4], %s572
          %s574 = sand.u32 %s139, 1
          %s575 = scalar_lea.vmem [#allocation5], %s574
          %576 = dma.done %s573, 16
        $region56: #{tpu_custom_call.1} parent=51 // pred_fallthru
          _
      $region52: #{tpu_custom_call.1} parent=5 // pred_fallthru
        _
    $region6: #{tpu_custom_call.1} parent=1 // loop_footer
      %s19 = sadd.s32 1, %s15
    $region7: #{tpu_custom_call.1} parent=1 // loop_footer_branch
      %14 = sbr.rel target = $region3
    $region8: #{tpu_custom_call.1} parent=1 // loop_exit
      _
    %577 = vsyncpa [#allocation3], 1
    %s578 = scalar_lea.sflag [#allocation3], 1
    %579 = vsyncpa %s578, 1
    %580 = vsyncpa [#allocation4], 1
    %s581 = scalar_lea.sflag [#allocation4], 1
    %582 = vsyncpa %s581, 1

</llo_original>
